<compile_context>
chip_gen: v5e
topology: v5e:2x2
jax: 0.10.0
libtpu: 0.0.40
codegen_flags: <defaults>
</compile_context>

<pallas_src>
import functools

import numpy as np
import jax
import jax.numpy as jnp
from jax import lax
from jax.experimental import pallas as pl
from jax.experimental.pallas import tpu as pltpu

# ---------------------------------------------------------------------------
# "configs" (deterministic, in-script)
# ---------------------------------------------------------------------------
PLATEAU_LENGTH = 8        # waveform plateau length
SLOPE_LENGTH   = 4        # waveform slope length
N_ELECTRODES   = 7        # driver activation electrodes
HIDDEN         = 32       # surrogate-model hidden width
AMPLIFICATION  = 28.5     # configs['driver']['amplification']
CLIP_LO        = -4.0 * AMPLIFICATION   # output_clipping_range * amplification
CLIP_HI        = 4.0 * AMPLIFICATION
VOLTAGE_RANGE  = (-1.2, 0.6)

TM_MAX = 8192             # time tile per grid step (multiple of 128); VMEM use
                          # ~8.6 MiB < 16 MiB v5e default scoped limit
CHUNK  = 128              # register-resident inner chunk (bounds live ranges)

# Packed-parameter row offsets inside the single (P_ROWS, 32) f32 array.
W1_OFF, W2_OFF, W3_OFF = 0, 8, 40      # w1 (7 rows), w2 (32 rows), w3*A (8 rows)
B1_ROW, B2_ROW, B3_ROW = 48, 49, 50    # b1, b2, b3*A (col 0)
P_ROWS = 56


def _round_up(n, m):
    return ((n + m - 1) // m) * m


# ---------------------------------------------------------------------------
# WaveformManager.plateaus_to_waveform  (vectorized JAX glue; logger path only)
# ---------------------------------------------------------------------------
def plateaus_to_waveform(plateaus, plateau_length=PLATEAU_LENGTH,
                         slope_length=SLOPE_LENGTH):
    """plateaus: (N*plateau_length, D) -> (waveform (L, D), mask (L,) bool)."""
    T, D = plateaus.shape
    n = T // plateau_length
    pts = plateaus.reshape(n, plateau_length, D)
    starts = pts[:, 0, :]                                    # (n, D)
    ends = pts[:, -1, :]                                     # (n, D)
    prev = jnp.concatenate([jnp.zeros((1, D), plateaus.dtype), ends[:-1]], axis=0)
    # NOTE: linspace includes both endpoints (slope samples duplicate the
    # adjacent plateau endpoints); these samples are masked out for the driver.
    ramp = jnp.linspace(0.0, 1.0, slope_length, dtype=plateaus.dtype)       # (s,)
    slopes = prev[:, None, :] + ramp[None, :, None] * (starts - prev)[:, None, :]
    body = jnp.concatenate([slopes, pts], axis=1).reshape(
        n * (slope_length + plateau_length), D)
    final = ends[-1][None, :] * (1.0 - ramp)[:, None]        # ramp back to 0
    wave = jnp.concatenate([body, final], axis=0)
    mask = np.concatenate([
        np.tile(np.concatenate([np.zeros(slope_length, bool),
                                np.ones(plateau_length, bool)]), n),
        np.zeros(slope_length, bool)])
    return wave, mask


# ---------------------------------------------------------------------------
# Pallas kernel: surrogate driver forward (MLP + amplification + clipping)
#   x_ref : (TM, 7)      f32 activation voltages (read straight from HBM layout)
#   p_ref : (P_ROWS, 32) f32 packed weights/biases (VMEM-resident, constant map)
#   o_ref : (1, TM)      f32 lane-dense per-sample output
# ---------------------------------------------------------------------------
def _driver_kernel(x_ref, p_ref, o_ref, *, n_chunks, chunk):
    # Weights: loaded once per grid step, cast to bf16 for the MXU.
    w1 = p_ref[W1_OFF:W1_OFF + N_ELECTRODES, :].astype(jnp.bfloat16)   # (7, 32)
    w2 = p_ref[W2_OFF:W2_OFF + HIDDEN, :].astype(jnp.bfloat16)         # (32, 32)
    w3 = p_ref[W3_OFF:W3_OFF + 8, :].astype(jnp.bfloat16)              # (8, 32) row0=(w3*A)^T
    b1 = p_ref[B1_ROW:B1_ROW + 1, :]                                   # (1, 32) f32
    b2 = p_ref[B2_ROW:B2_ROW + 1, :]                                   # (1, 32) f32
    b3a = p_ref[B3_ROW:B3_ROW + 1, 0:1]                                # (1, 1)  f32 (= b3*A)

    def chunk_compute(off):
        # (C, 7) f32 -> bf16; matmuls accumulate in f32 (preferred_element_type),
        # bias/ReLU stay f32 (no bf16 VALU on v5e), cast bf16 before next dot.
        x = x_ref[pl.ds(off, chunk), :].astype(jnp.bfloat16)            # (C, 7)
        h = jnp.dot(x, w1, preferred_element_type=jnp.float32)          # (C, 32)
        h = jnp.maximum(h + b1, 0.0).astype(jnp.bfloat16)
        h = jnp.dot(h, w2, preferred_element_type=jnp.float32)          # (C, 32)
        h = jnp.maximum(h + b2, 0.0).astype(jnp.bfloat16)
        # Final 32 -> 1 contraction on the MXU with the RHS (time) transposed
        # (flash-attention q@k.T dim numbers) -> lane-dense (8, C); keep row 0.
        y = lax.dot_general(w3, h, (((1,), (1,)), ((), ())),
                            preferred_element_type=jnp.float32)         # (8, C)
        y = y[0:1, :] + b3a                                              # (1, C)
        o_ref[:, pl.ds(off, chunk)] = jnp.clip(y, CLIP_LO, CLIP_HI)

    if n_chunks == 1:
        chunk_compute(0)
    else:
        def loop_body(c, carry):
            chunk_compute(pl.multiple_of(c * chunk, chunk))
            return carry
        lax.fori_loop(0, n_chunks, loop_body, 0)


def _pack_params(params):
    """Pack (w1,b1,w2,b2,w3,b3) into one (P_ROWS, 32) f32 array; w3/b3 pre-scaled
    by AMPLIFICATION so the kernel epilogue is just add + clip."""
    w1, b1, w2, b2, w3, b3 = params
    p = jnp.zeros((P_ROWS, HIDDEN), jnp.float32)
    p = p.at[W1_OFF:W1_OFF + N_ELECTRODES, :].set(w1.astype(jnp.float32))
    p = p.at[W2_OFF:W2_OFF + HIDDEN, :].set(w2.astype(jnp.float32))
    p = p.at[W3_OFF, :].set((w3[:, 0] * AMPLIFICATION).astype(jnp.float32))
    p = p.at[B1_ROW, :].set(b1.reshape(-1).astype(jnp.float32))
    p = p.at[B2_ROW, :].set(b2.reshape(-1).astype(jnp.float32))
    p = p.at[B3_ROW, 0].set((b3.reshape(()) * AMPLIFICATION).astype(jnp.float32))
    return p


@jax.jit
def driver_forward(x, params):
    """x: (L, 7) activation voltages -> (L, 1) amplified, clipped outputs."""
    x = x.astype(jnp.float32)
    L = x.shape[0]
    p = _pack_params(params)

    if L <= 128:
        tm = L                     # single full-extent block (full-dim rule)
    else:
        # >= 2 grid steps whenever possible so v7x megacore shards the tiles.
        tm = min(TM_MAX, max(128, _round_up(-(-L // 2), 128)))
    chunk = min(CHUNK, tm)
    assert tm % chunk == 0
    n_chunks = tm // chunk
    grid = (pl.cdiv(L, tm),)       # non-divisible tail handled by Pallas padding

    kernel = functools.partial(_driver_kernel, n_chunks=n_chunks, chunk=chunk)
    out = pl.pallas_call(
        kernel,
        out_shape=jax.ShapeDtypeStruct((1, L), jnp.float32),
        grid=grid,
        in_specs=[
            pl.BlockSpec((tm, N_ELECTRODES), lambda i: (i, 0)),   # streamed time tiles
            pl.BlockSpec((P_ROWS, HIDDEN), lambda i: (0, 0)),     # params: VMEM-resident
        ],
        out_specs=pl.BlockSpec((1, tm), lambda i: (0, i)),        # lane-dense stores
        compiler_params=pltpu.CompilerParams(
            dimension_semantics=("parallel",)),                   # v7x: 2 TCs
    )(x, p)

    return out.reshape(L, 1)       # (1, L) -> (L, 1) is a free reshape


# ---------------------------------------------------------------------------
# HardwareProcessor.forward
# ---------------------------------------------------------------------------
def hardware_processor_forward(plateaus, params, logger=None):
    # The surrogate driver is point-wise per sample and `output[mask]` would
    # discard every slope sample, so the driver runs on plateau rows only.
    # The full waveform is still produced for the logger path, matching
    # logger.log_output(x) in the reference module.
    if logger is not None:
        wave, _mask = plateaus_to_waveform(plateaus)
        logger(wave)
    return driver_forward(plateaus, params)

    # TODO(synk): real NIDAQ hardware driver I/O, driver.reset()/close_tasks()/
    # is_hardware() have no Pallas equivalent; the driver here is the
    # deterministic 'simulation_debug' surrogate.


# ---------------------------------------------------------------------------
if __name__ == "__main__":
    key = jax.random.PRNGKey(0)
    k_in, k1, k2, k3, kb1, kb2, kb3 = jax.random.split(key, 7)

    # Input: 32 data points expanded to plateaus of length PLATEAU_LENGTH
    # -> L = 256 plateau samples (2 grid steps of 128: exercises the pipeline).
    n_points = 32
    point_vals = jax.random.uniform(
        k_in, (n_points, N_ELECTRODES), jnp.float32,
        minval=VOLTAGE_RANGE[0], maxval=VOLTAGE_RANGE[1])
    plateaus = jnp.repeat(point_vals, PLATEAU_LENGTH, axis=0)   # (256, 7)

    # Deterministic surrogate-model parameters.
    w1 = 0.30 * jax.random.normal(k1, (N_ELECTRODES, HIDDEN), jnp.float32)
    b1 = 0.05 * jax.random.normal(kb1, (1, HIDDEN), jnp.float32)
    w2 = 0.20 * jax.random.normal(k2, (HIDDEN, HIDDEN), jnp.float32)
    b2 = 0.05 * jax.random.normal(kb2, (1, HIDDEN), jnp.float32)
    w3 = 0.20 * jax.random.normal(k3, (HIDDEN, 1), jnp.float32)
    b3 = 0.05 * jax.random.normal(kb3, (1, 1), jnp.float32)
    params = (w1, b1, w2, b2, w3, b3)

    logged = {}
    out = hardware_processor_forward(plateaus, params,
                                     logger=lambda w: logged.setdefault("wave", w))
    out = jax.block_until_ready(out)

    assert out.shape == (n_points * PLATEAU_LENGTH, 1), out.shape
    assert out.dtype == jnp.float32

    # Vectorized waveform glue sanity check (slopes + plateaus + final slope).
    wave = logged["wave"]
    assert wave.shape == (n_points * (PLATEAU_LENGTH + SLOPE_LENGTH) + SLOPE_LENGTH,
                          N_ELECTRODES), wave.shape

    # Pure-JAX f32 reference for the driver surrogate on plateau rows.
    ref = jnp.maximum(plateaus @ w1 + b1, 0.0)
    ref = jnp.maximum(ref @ w2 + b2, 0.0)
    ref = jnp.clip((ref @ w3 + b3) * AMPLIFICATION, CLIP_LO, CLIP_HI)

    # Tolerance accounts for bf16 MXU operands (f32 accumulation): abs error of
    # a few tenths on outputs of magnitude O(10-100).
    np.testing.assert_allclose(np.asarray(out), np.asarray(ref),
                               rtol=5e-2, atol=5e-1)

    print("KERNEL_OK")
</pallas_src>

<mosaic_0001>
module attributes {stable_mosaic.version = 11 : i64} {
  func.func @_driver_kernel(%arg0: i32, %arg1: memref<128x7xf32, #tpu.memory_space<vmem>>, %arg2: memref<56x32xf32, #tpu.memory_space<vmem>>, %arg3: memref<1x128xf32, #tpu.memory_space<vmem>>) attributes {dimension_semantics = [#tpu.dimension_semantics<parallel>], iteration_bounds = array<i64: 2>, scalar_prefetch = 0 : i64, scratch_operands = 0 : i64, tpu.core_type = #tpu.core_type<tc>, window_params = [{transform_indices = @transform_0, window_bounds = array<i64: 128, 7>}, {pipeline_mode = #tpu.pipeline_mode<synchronous>, transform_indices = @transform_1, window_bounds = array<i64: 56, 32>}, {transform_indices = @transform_2, window_bounds = array<i64: 1, 128>}]} {
    %c0 = arith.constant 0 : index
    %c0_0 = arith.constant 0 : index
    %0 = vector.load %arg2[%c0, %c0_0] : memref<56x32xf32, #tpu.memory_space<vmem>>, vector<7x32xf32>
    %1 = arith.truncf %0 : vector<7x32xf32> to vector<7x32xbf16>
    %c8 = arith.constant 8 : index
    %c0_1 = arith.constant 0 : index
    %2 = vector.load %arg2[%c8, %c0_1] : memref<56x32xf32, #tpu.memory_space<vmem>>, vector<32x32xf32>
    %3 = arith.truncf %2 : vector<32x32xf32> to vector<32x32xbf16>
    %c40 = arith.constant 40 : index
    %c0_2 = arith.constant 0 : index
    %4 = vector.load %arg2[%c40, %c0_2] : memref<56x32xf32, #tpu.memory_space<vmem>>, vector<8x32xf32>
    %5 = arith.truncf %4 : vector<8x32xf32> to vector<8x32xbf16>
    %c48 = arith.constant 48 : index
    %c0_3 = arith.constant 0 : index
    %6 = vector.load %arg2[%c48, %c0_3] : memref<56x32xf32, #tpu.memory_space<vmem>>, vector<1x32xf32>
    %c49 = arith.constant 49 : index
    %c0_4 = arith.constant 0 : index
    %7 = vector.load %arg2[%c49, %c0_4] : memref<56x32xf32, #tpu.memory_space<vmem>>, vector<1x32xf32>
    %c50 = arith.constant 50 : index
    %c0_5 = arith.constant 0 : index
    %8 = vector.load %arg2[%c50, %c0_5] : memref<56x32xf32, #tpu.memory_space<vmem>>, vector<1x1xf32>
    %c0_6 = arith.constant 0 : index
    %c0_7 = arith.constant 0 : index
    %9 = vector.load %arg1[%c0_6, %c0_7] : memref<128x7xf32, #tpu.memory_space<vmem>>, vector<128x7xf32>
    %10 = arith.truncf %9 : vector<128x7xf32> to vector<128x7xbf16>
    %cst = arith.constant dense<0.000000e+00> : vector<128x32xf32>
    %11 = tpu.matmul %10, %1, %cst {dimension_numbers = #tpu.dot_dimension_numbers<[1], [0], [0], [1], [0, 0, 1, 1], [], []>} : vector<128x7xbf16>, vector<7x32xbf16>, vector<128x32xf32> -> vector<128x32xf32>
    %12 = vector.broadcast %6 : vector<1x32xf32> to vector<128x32xf32>
    %13 = arith.addf %11, %12 : vector<128x32xf32>
    %cst_8 = arith.constant 0.000000e+00 : f32
    %14 = vector.broadcast %cst_8 : f32 to vector<128x32xf32>
    %15 = arith.maximumf %13, %14 : vector<128x32xf32>
    %16 = arith.truncf %15 : vector<128x32xf32> to vector<128x32xbf16>
    %cst_9 = arith.constant dense<0.000000e+00> : vector<128x32xf32>
    %17 = tpu.matmul %16, %3, %cst_9 {dimension_numbers = #tpu.dot_dimension_numbers<[1], [0], [0], [1], [0, 0, 1, 1], [], []>} : vector<128x32xbf16>, vector<32x32xbf16>, vector<128x32xf32> -> vector<128x32xf32>
    %18 = vector.broadcast %7 : vector<1x32xf32> to vector<128x32xf32>
    %19 = arith.addf %17, %18 : vector<128x32xf32>
    %cst_10 = arith.constant 0.000000e+00 : f32
    %20 = vector.broadcast %cst_10 : f32 to vector<128x32xf32>
    %21 = arith.maximumf %19, %20 : vector<128x32xf32>
    %22 = arith.truncf %21 : vector<128x32xf32> to vector<128x32xbf16>
    %cst_11 = arith.constant dense<0.000000e+00> : vector<8x128xf32>
    %23 = tpu.matmul %5, %22, %cst_11 {dimension_numbers = #tpu.dot_dimension_numbers<[1], [1], [0], [0], [0, 0, 1, 0], [], []>} : vector<8x32xbf16>, vector<128x32xbf16>, vector<8x128xf32> -> vector<8x128xf32>
    %24 = vector.extract_strided_slice %23 {offsets = [0, 0], sizes = [1, 128], strides = [1, 1]} : vector<8x128xf32> to vector<1x128xf32>
    %25 = vector.broadcast %8 : vector<1x1xf32> to vector<1x128xf32>
    %26 = arith.addf %24, %25 : vector<1x128xf32>
    %cst_12 = arith.constant -1.140000e+02 : f32
    %cst_13 = arith.constant 1.140000e+02 : f32
    %27 = vector.broadcast %cst_12 : f32 to vector<1x128xf32>
    %28 = arith.maximumf %27, %26 : vector<1x128xf32>
    %29 = vector.broadcast %cst_13 : f32 to vector<1x128xf32>
    %30 = arith.minimumf %29, %28 : vector<1x128xf32>
    %c0_14 = arith.constant 0 : index
    %c0_15 = arith.constant 0 : index
    %31 = vector.load %arg3[%c0_14, %c0_15] : memref<1x128xf32, #tpu.memory_space<vmem>>, vector<1x128xf32>
    tpu.vector_store %arg3[%c0_14, %c0_15], %30 {strides = array<i32>} : memref<1x128xf32, #tpu.memory_space<vmem>>, vector<1x128xf32>,
    return
  }
  func.func @transform_0(%arg0: i32) -> (i32, i32) {
    %c0_i32 = arith.constant 0 : i32
    %c0_i32_0 = arith.constant 0 : i32
    return %arg0, %c0_i32 : i32, i32
  }
  func.func @transform_1(%arg0: i32) -> (i32, i32) {
    %c0_i32 = arith.constant 0 : i32
    %c0_i32_0 = arith.constant 0 : i32
    %c0_i32_1 = arith.constant 0 : i32
    return %c0_i32, %c0_i32_0 : i32, i32
  }
  func.func @transform_2(%arg0: i32) -> (i32, i32) {
    %c0_i32 = arith.constant 0 : i32
    %c0_i32_0 = arith.constant 0 : i32
    return %c0_i32, %arg0 : i32, i32
  }
}

</mosaic_0001>

<llo_original>
// kernel: driver_forward.1
$region0: #{driver_forward.1}
  #allocation0 [shape = 'u32[]', space=smem, size = 0x4, offset = 0x4, fixed_abs, tag = 'smem constant byte address 0x4 - core index']
  #allocation1 [shape = 'u32[72,128]{1,0:T(1,128)}', space=vmem, size = 0x9000, scoped, tag = 'internal scratch']
  %s0 = inlined_call_operand.vmem [shape: f32[256,7], index: 0, kind: input, shape index: {}]
  %s1 = inlined_call_operand.vmem [shape: f32[56,32], index: 1, kind: input, shape index: {}]
  %s2 = inlined_call_operand.hbm [shape: f32[1,256], index: 2, kind: output, shape index: {}]
  %s3 = sld [smem:[#allocation0]]
  $region41: #{driver_forward.1} parent=0
    _
  %s5 = ssub.s32 1, %s3
  %s6 = scalar_select 0, %s5, %s3
  $region1: #{driver_forward.1} parent=0
    #allocation2 [shape = 'u8[1024]{0}', space=vmem, size = 0x400, scoped, tag = 'output window, operand 0']
    #allocation3 [shape = 's32[2]{0}', space=sflag, size = 0x8, scoped, tag = 'scoped memory for driver_forward.1']
    %7 = vsyncpa [#allocation3], 0
    %s8 = scalar_lea.sflag [#allocation3], 1
    %9 = vsyncpa %s8, 0
    loop: start=0, step=1, limit=4
    $region2: #{driver_forward.1} parent=1 // loop_pre_header
      _
    $region3: #{driver_forward.1} parent=1 // loop_header
      %s11 = sphi 0, %s15
      %p12 = scmp.ge.s32.totalorder %s11, 4
      %s21 = sphi 0, %s23
      %s24 = sphi 0, %s21
      %s25 = sphi 0, %s24
      %s41 = sphi 0, %s25
      %s45 = sphi 0, %s45
      %s47 = sphi 0, %s45
      %s48 = sphi 0, %s47
      %s62 = sphi 0, %s48
      %s68 = sphi 0, %s70
      %s71 = sphi 0, %s68
      %s72 = sphi 0, %s71
      %s88 = sphi 0, %s72
    $region4: #{driver_forward.1} parent=1 // loop_header_branch
      %14 = sbr.rel (%p12) target = $region8
    $region5: #{driver_forward.1} parent=1 // loop_body
      %s16 = ssub.s32 %s11, 1
      %s17 = ssub.s32 %s11, 2
      %s18 = sadd.s32 %s11, 1
      %s19 = ssub.s32 %s11, %s18
      %p20 = scmp.eq.s32.totalorder %s19, 0
      %s22 = sadd.s32 %s21, 1
      %s23 = scalar_select %p20, %s21, %s22
      %p26 = pneg %p20
      %p27 = scmp.eq.s32.totalorder %s11, 1
      %p28 = por %p26, %p27
      %p29 = scmp.ne.s32.totalorder %s21, %s24
      %p30 = scmp.eq.s32.totalorder %s11, 0
      %p31 = por %p29, %p30
      %p32 = scmp.ne.s32.totalorder %s21, %s24
      %p33 = scmp.eq.s32.totalorder %s16, 1
      %p34 = por %p32, %p33
      %p35 = scmp.ne.s32.totalorder %s24, %s25
      %p36 = scmp.eq.s32.totalorder %s16, 0
      %p37 = por %p35, %p36
      %p38 = scmp.ne.s32.totalorder %s24, %s25
      %p39 = scmp.eq.s32.totalorder %s17, 1
      %p40 = por %p38, %p39
      %p42 = scmp.ne.s32.totalorder %s25, %s41
      %p43 = scmp.eq.s32.totalorder %s17, 0
      %p44 = por %p42, %p43
      %s46 = sadd.s32 %s45, 1
      %p49 = scmp.eq.s32.totalorder %s11, 1
      %p50 = scmp.ne.s32.totalorder %s45, %s47
      %p51 = scmp.eq.s32.totalorder %s11, 0
      %p52 = por %p50, %p51
      %p53 = scmp.ne.s32.totalorder %s45, %s47
      %p54 = scmp.eq.s32.totalorder %s16, 1
      %p55 = por %p53, %p54
      %p56 = scmp.ne.s32.totalorder %s47, %s48
      %p57 = scmp.eq.s32.totalorder %s16, 0
      %p58 = por %p56, %p57
      %p59 = scmp.ne.s32.totalorder %s47, %s48
      %p60 = scmp.eq.s32.totalorder %s17, 1
      %p61 = por %p59, %p60
      %p63 = scmp.ne.s32.totalorder %s48, %s62
      %p64 = scmp.eq.s32.totalorder %s17, 0
      %p65 = por %p63, %p64
      %s66 = ssub.s32 %s11, %s18
      %p67 = scmp.eq.s32.totalorder %s66, 0
      %s69 = sadd.s32 %s68, 1
      %s70 = scalar_select %p67, %s68, %s69
      %p73 = pneg %p67
      %p74 = scmp.eq.s32.totalorder %s11, 1
      %p75 = por %p73, %p74
      %p76 = scmp.ne.s32.totalorder %s68, %s71
      %p77 = scmp.eq.s32.totalorder %s11, 0
      %p78 = por %p76, %p77
      %p79 = scmp.ne.s32.totalorder %s68, %s71
      %p80 = scmp.eq.s32.totalorder %s16, 1
      %p81 = por %p79, %p80
      %p82 = scmp.ne.s32.totalorder %s71, %s72
      %p83 = scmp.eq.s32.totalorder %s16, 0
      %p84 = por %p82, %p83
      %p85 = scmp.ne.s32.totalorder %s71, %s72
      %p86 = scmp.eq.s32.totalorder %s17, 1
      %p87 = por %p85, %p86
      %p89 = scmp.ne.s32.totalorder %s72, %s88
      %p90 = scmp.eq.s32.totalorder %s17, 0
      %p91 = por %p89, %p90
      %p92 = scmp.le.s32.totalorder 1, %s11
      %p93 = scmp.lt.s32.totalorder %s11, 3
      %p94 = pnand %p92, %p93
      %p95 = pneg %p94
      // Predicated region
      $region9: #{driver_forward.1} parent=5 // pred_check
        _
      $region10: #{driver_forward.1} parent=5 // pred_check_branch
        %97 = sbr.rel (%p94) target = $region12
      $region11: #{driver_forward.1} parent=5 // pred_region
        %s98 = ssub.s32 %s11, 1
        // Predicated region
        $region13: #{driver_forward.1} parent=11 // pred_check
          %p99 = pneg %p58
        $region14: #{driver_forward.1} parent=11 // pred_check_branch
          %101 = sbr.rel (%p99) target = $region16
        $region15: #{driver_forward.1} parent=11 // pred_region
          _
        $region16: #{driver_forward.1} parent=11 // pred_fallthru
          _
      $region12: #{driver_forward.1} parent=5 // pred_fallthru
        _
      %p102 = scmp.lt.s32.totalorder %s11, 2
      // Predicated region
      $region17: #{driver_forward.1} parent=5 // pred_check
        %p103 = pneg %p102
      $region18: #{driver_forward.1} parent=5 // pred_check_branch
        %105 = sbr.rel (%p103) target = $region20
      $region19: #{driver_forward.1} parent=5 // pred_region
        // Predicated region
        $region21: #{driver_forward.1} parent=19 // pred_check
          %p106 = pneg %p31
        $region22: #{driver_forward.1} parent=19 // pred_check_branch
          %108 = sbr.rel (%p106) target = $region24
        $region23: #{driver_forward.1} parent=19 // pred_region
          %s109 = smul.u32 16, %s11
          %p110 = scmp.lt.s32.totalorder %s109, 31
          %s111 = scalar_select %p110, %s109, 31
          %s112 = smul.addr %s111, 8
          %s113 = scalar_lea.vmem %s0, %s112
          %s114 = smul.u32 16, %s11
        $region24: #{driver_forward.1} parent=19 // pred_fallthru
          _
      $region20: #{driver_forward.1} parent=5 // pred_fallthru
        _
      %p115 = scmp.le.s32.totalorder 1, %s11
      %p116 = scmp.lt.s32.totalorder %s11, 3
      %p117 = pnand %p115, %p116
      %p118 = pneg %p117
      // Predicated region
      $region25: #{driver_forward.1} parent=5 // pred_check
        _
      $region26: #{driver_forward.1} parent=5 // pred_check_branch
        %120 = sbr.rel (%p117) target = $region28
      $region27: #{driver_forward.1} parent=5 // pred_region
        %s121 = ssub.s32 %s11, 1
        %s122 = smul.u32 16, %s16
        %p123 = scmp.lt.s32.totalorder %s122, 31
        %s124 = scalar_select %p123, %s122, 31
        %s125 = smul.addr %s124, 8
        %s126 = scalar_lea.vmem %s0, %s125
        %p127 = pneg %p37
        %p128 = pneg %p34
        %p129 = pneg %p58
        %p130 = pneg %p55
        %p131 = pneg %p84
        %p132 = pneg %p81
        %s133 = sand.u32 %s71, 1
        %s134 = scalar_lea.sflag [#allocation3], %s133
        %s135 = sand.u32 %s71, 1
        %s136 = scalar_lea.vmem [#allocation2], %s135
        %s137 = smul.u32 16, %s16
        %p138 = scmp.lt.s32.totalorder %s137, 31
        %s139 = scalar_select %p138, %s137, 31
        %s140 = smul.addr %s139, 8
        %s141 = scalar_lea.vmem %s0, %s140
        %s142 = smul.u32 16, %s16
        %v144 = vld [vmem:[%s1] sm:$0x7f]
        %v145 = vpack.c.bf16 %v144, %v144
        %v146 = vld [vmem:[%s1 + $0x8] sm:$0xff]
        %v147 = vld [vmem:[%s1 + $0x10] sm:$0xff]
        %v148 = vld [vmem:[%s1 + $0x18] sm:$0xff]
        %v149 = vld [vmem:[%s1 + $0x20] sm:$0xff]
        %v150 = vpack.c.bf16 %v147, %v146
        %v151 = vpack.c.bf16 %v149, %v148
        %v152 = vld [vmem:[%s1 + $0x28] sm:$0xff]
        %v153 = vpack.c.bf16 %v152, %v152
        %v154 = vld [vmem:[%s1 + $0x30] sm:$0x1]
        %v155 = vld [vmem:[%s1 + $0x31] sm:$0x1]
        %v156 = vld [vmem:[%s1 + $0x32] sm:$0x1]
        %v157 = vld [vmem:[%s141] sm:$0xff]
        %v158 = vld [vmem:[%s141 + $0x8] sm:$0xff]
        %v159 = vld [vmem:[%s141 + $0x10] sm:$0xff]
        %v160 = vld [vmem:[%s141 + $0x18] sm:$0xff]
        %v161 = vld [vmem:[%s141 + $0x20] sm:$0xff]
        %v162 = vld [vmem:[%s141 + $0x28] sm:$0xff]
        %v163 = vld [vmem:[%s141 + $0x30] sm:$0xff]
        %v164 = vld [vmem:[%s141 + $0x38] sm:$0xff]
        %v165 = vld [vmem:[%s141 + $0x40] sm:$0xff]
        %v166 = vld [vmem:[%s141 + $0x48] sm:$0xff]
        %v167 = vld [vmem:[%s141 + $0x50] sm:$0xff]
        %v168 = vld [vmem:[%s141 + $0x58] sm:$0xff]
        %v169 = vld [vmem:[%s141 + $0x60] sm:$0xff]
        %v170 = vld [vmem:[%s141 + $0x68] sm:$0xff]
        %v171 = vld [vmem:[%s141 + $0x70] sm:$0xff]
        %v172 = vld [vmem:[%s141 + $0x78] sm:$0xff]
        %v173 = vpack.c.bf16 %v158, %v157
        %v174 = vpack.c.bf16 %v160, %v159
        %v175 = vpack.c.bf16 %v162, %v161
        %v176 = vpack.c.bf16 %v164, %v163
        %v177 = vpack.c.bf16 %v166, %v165
        %v178 = vpack.c.bf16 %v168, %v167
        %v179 = vpack.c.bf16 %v170, %v169
        %v180 = vpack.c.bf16 %v172, %v171
        %v181 = vperm.slane %v154, 0
        %vm182 = vcmask 56320
        %v184 = vsel %vm182, %v173, 0
        %v187 = vsel %vm182, %v174, 0
        %v190 = vsel %vm182, %v175, 0
        %v193 = vsel %vm182, %v176, 0
        %v196 = vsel %vm182, %v177, 0
        %v199 = vsel %vm182, %v178, 0
        %v202 = vsel %vm182, %v179, 0
        %v205 = vsel %vm182, %v180, 0
        %vm207 = vcmask 1042432
        %vm208 = vcmask 1043456
        %v209 = vsel %vm207, 4294967295, 65535
        %v210 = vsel %vm208, %v209, 0
        %v212 = vand.u32 %v145, %v210
        %214 = vmatpush.bf16.msra.mxu0 0
        %215 = vmatpush.bf16.msra.mxu0 0
        %216 = vmatpush.bf16.msra.mxu0 0
        %217 = vmatpush.bf16.msra.mxu0 0
        %218 = vmatpush.bf16.msra.mxu0 0
        %219 = vmatpush.bf16.msra.mxu0 0
        %220 = vmatpush.bf16.msra.mxu0 0
        %221 = vmatpush.bf16.msra.mxu0 %v212
        %222 = vmatmul.bf16.gmra.mxu0 %v184
        %v223 = vpop.f32.mrf.mxu0
        %v224 = vadd.f32 %v181, %v223
        %v225 = vpop.f32.mrf.mxu0
        %v226 = vadd.f32 %v181, %v225
        %227 = vmatmul.bf16.gmra.mxu0 %v187
        %v228 = vpop.f32.mrf.mxu0
        %v229 = vadd.f32 %v181, %v228
        %v230 = vpop.f32.mrf.mxu0
        %v231 = vadd.f32 %v181, %v230
        %232 = vmatmul.bf16.gmra.mxu0 %v190
        %v233 = vpop.f32.mrf.mxu0
        %v234 = vadd.f32 %v181, %v233
        %v235 = vpop.f32.mrf.mxu0
        %v236 = vadd.f32 %v181, %v235
        %237 = vmatmul.bf16.gmra.mxu0 %v193
        %v238 = vpop.f32.mrf.mxu0
        %v239 = vadd.f32 %v181, %v238
        %v240 = vpop.f32.mrf.mxu0
        %v241 = vadd.f32 %v181, %v240
        %242 = vmatmul.bf16.gmra.mxu0 %v196
        %v243 = vpop.f32.mrf.mxu0
        %v244 = vadd.f32 %v181, %v243
        %v245 = vpop.f32.mrf.mxu0
        %v246 = vadd.f32 %v181, %v245
        %247 = vmatmul.bf16.gmra.mxu0 %v199
        %v248 = vpop.f32.mrf.mxu0
        %v249 = vadd.f32 %v181, %v248
        %v250 = vpop.f32.mrf.mxu0
        %v251 = vadd.f32 %v181, %v250
        %252 = vmatmul.bf16.gmra.mxu0 %v202
        %v253 = vpop.f32.mrf.mxu0
        %v254 = vadd.f32 %v181, %v253
        %v255 = vpop.f32.mrf.mxu0
        %v256 = vadd.f32 %v181, %v255
        %257 = vmatmul.bf16.gmra.mxu0 %v205
        %v258 = vpop.f32.mrf.mxu0
        %v259 = vadd.f32 %v181, %v258
        %v260 = vpop.f32.mrf.mxu0
        %v261 = vadd.f32 %v181, %v260
        %262 = vdwg.mxu0
        %v263 = vmax.f32 %v224, 0.0
        %v264 = vmax.f32 %v226, 0.0
        %v265 = vmax.f32 %v229, 0.0
        %v266 = vmax.f32 %v231, 0.0
        %v267 = vmax.f32 %v234, 0.0
        %v268 = vmax.f32 %v236, 0.0
        %v269 = vmax.f32 %v239, 0.0
        %v270 = vmax.f32 %v241, 0.0
        %v271 = vmax.f32 %v244, 0.0
        %v272 = vmax.f32 %v246, 0.0
        %v273 = vmax.f32 %v249, 0.0
        %v274 = vmax.f32 %v251, 0.0
        %v275 = vmax.f32 %v254, 0.0
        %v276 = vmax.f32 %v256, 0.0
        %v277 = vmax.f32 %v259, 0.0
        %v278 = vmax.f32 %v261, 0.0
        %v279 = vpack.c.bf16 %v264, %v263
        %v280 = vpack.c.bf16 %v266, %v265
        %v281 = vpack.c.bf16 %v268, %v267
        %v282 = vpack.c.bf16 %v270, %v269
        %v283 = vpack.c.bf16 %v272, %v271
        %v284 = vpack.c.bf16 %v274, %v273
        %v285 = vpack.c.bf16 %v276, %v275
        %v286 = vpack.c.bf16 %v278, %v277
        %v287 = vperm.slane %v155, 0
        %vm288 = vcmask 261120
        %v290 = vsel %vm288, %v279, 0
        %v293 = vsel %vm288, %v280, 0
        %v296 = vsel %vm288, %v281, 0
        %v299 = vsel %vm288, %v282, 0
        %v302 = vsel %vm288, %v283, 0
        %v305 = vsel %vm288, %v284, 0
        %v308 = vsel %vm288, %v285, 0
        %v311 = vsel %vm288, %v286, 0
        %313 = vmatpush.bf16.msra.mxu0 0
        %314 = vmatpush.bf16.msra.mxu0 0
        %315 = vmatpush.bf16.msra.mxu0 0
        %316 = vmatpush.bf16.msra.mxu0 0
        %317 = vmatpush.bf16.msra.mxu0 0
        %318 = vmatpush.bf16.msra.mxu0 0
        %319 = vmatpush.bf16.msra.mxu0 %v151
        %320 = vmatpush.bf16.msra.mxu0 %v150
        %321 = vmatmul.bf16.gmra.mxu0 %v290
        %v322 = vpop.f32.mrf.mxu0
        %v323 = vadd.f32 %v287, %v322
        %v324 = vpop.f32.mrf.mxu0
        %v325 = vadd.f32 %v287, %v324
        %326 = vmatmul.bf16.gmra.mxu0 %v293
        %v327 = vpop.f32.mrf.mxu0
        %v328 = vadd.f32 %v287, %v327
        %v329 = vpop.f32.mrf.mxu0
        %v330 = vadd.f32 %v287, %v329
        %331 = vmatmul.bf16.gmra.mxu0 %v296
        %v332 = vpop.f32.mrf.mxu0
        %v333 = vadd.f32 %v287, %v332
        %v334 = vpop.f32.mrf.mxu0
        %v335 = vadd.f32 %v287, %v334
        %336 = vmatmul.bf16.gmra.mxu0 %v299
        %v337 = vpop.f32.mrf.mxu0
        %v338 = vadd.f32 %v287, %v337
        %v339 = vpop.f32.mrf.mxu0
        %v340 = vadd.f32 %v287, %v339
        %341 = vmatmul.bf16.gmra.mxu0 %v302
        %v342 = vpop.f32.mrf.mxu0
        %v343 = vadd.f32 %v287, %v342
        %v344 = vpop.f32.mrf.mxu0
        %v345 = vadd.f32 %v287, %v344
        %346 = vmatmul.bf16.gmra.mxu0 %v305
        %v347 = vpop.f32.mrf.mxu0
        %v348 = vadd.f32 %v287, %v347
        %v349 = vpop.f32.mrf.mxu0
        %v350 = vadd.f32 %v287, %v349
        %351 = vmatmul.bf16.gmra.mxu0 %v308
        %v352 = vpop.f32.mrf.mxu0
        %v353 = vadd.f32 %v287, %v352
        %v354 = vpop.f32.mrf.mxu0
        %v355 = vadd.f32 %v287, %v354
        %356 = vmatmul.bf16.gmra.mxu0 %v311
        %v357 = vpop.f32.mrf.mxu0
        %v358 = vadd.f32 %v287, %v357
        %v359 = vpop.f32.mrf.mxu0
        %v360 = vadd.f32 %v287, %v359
        %361 = vdwg.mxu0
        %v362 = vmax.f32 %v323, 0.0
        %v363 = vmax.f32 %v325, 0.0
        %v364 = vmax.f32 %v328, 0.0
        %v365 = vmax.f32 %v330, 0.0
        %v366 = vmax.f32 %v333, 0.0
        %v367 = vmax.f32 %v335, 0.0
        %v368 = vmax.f32 %v338, 0.0
        %v369 = vmax.f32 %v340, 0.0
        %v370 = vmax.f32 %v343, 0.0
        %v371 = vmax.f32 %v345, 0.0
        %v372 = vmax.f32 %v348, 0.0
        %v373 = vmax.f32 %v350, 0.0
        %v374 = vmax.f32 %v353, 0.0
        %v375 = vmax.f32 %v355, 0.0
        %v376 = vmax.f32 %v358, 0.0
        %v377 = vmax.f32 %v360, 0.0
        %v378 = vpack.c.bf16 %v363, %v362
        %v379 = vpack.c.bf16 %v365, %v364
        %v380 = vpack.c.bf16 %v367, %v366
        %v381 = vpack.c.bf16 %v369, %v368
        %v382 = vpack.c.bf16 %v371, %v370
        %v383 = vpack.c.bf16 %v373, %v372
        %v384 = vpack.c.bf16 %v375, %v374
        %v385 = vpack.c.bf16 %v377, %v376
        %v387 = vsel %vm288, %v153, 0
        %v390 = vsel %vm288, %v378, 0
        %v393 = vsel %vm288, %v379, 0
        %v396 = vsel %vm288, %v380, 0
        %v399 = vsel %vm288, %v381, 0
        %v402 = vsel %vm288, %v382, 0
        %v405 = vsel %vm288, %v383, 0
        %v408 = vsel %vm288, %v384, 0
        %v411 = vsel %vm288, %v385, 0
        %413 = vmatpush.bf16.xpose.msra.mxu0 %v411
        %414 = vmatpush.bf16.xpose.msra.mxu0 %v408
        %415 = vmatpush.bf16.xpose.msra.mxu0 %v405
        %416 = vmatpush.bf16.xpose.msra.mxu0 %v402
        %417 = vmatpush.bf16.xpose.msra.mxu0 %v399
        %418 = vmatpush.bf16.xpose.msra.mxu0 %v396
        %419 = vmatpush.bf16.xpose.msra.mxu0 %v393
        %420 = vmatpush.bf16.xpose.msra.mxu0 %v390
        %421 = vmatmul.bf16.gmra.mxu0 %v387
        %v422 = vpop.f32.mrf.mxu0
        %v423 = vadd.f32 0.0, %v422
        %v424 = vpop.f32.mrf.mxu0
        %425 = vdwg.mxu0
        %427 = vset.pattern.permute.xlu0 0
        %428 = vperm.xlu0 %427, %v156
        %v429 = vpop.permute.xlu0 %428
        %v431 = vadd.f32 %v423, %v429
        %v432 = vmax.f32 %v431, -114.0
        %v433 = vmin.f32 %v432, 114.0
        %434 = vst [vmem:[%s136] sm:$0x1] %v433
        %s435 = sand.u32 %s71, 1
        %s436 = scalar_lea.sflag [#allocation3], %s435
        %s437 = sand.u32 %s71, 1
        %s438 = scalar_lea.vmem [#allocation2], %s437
        // Predicated region
        $region29: #{driver_forward.1} parent=27 // pred_check
          %p439 = pneg %p81
        $region30: #{driver_forward.1} parent=27 // pred_check_branch
          %441 = sbr.rel (%p439) target = $region32
        $region31: #{driver_forward.1} parent=27 // pred_region
          %443 = vsyncadd %s436, 0
          %s444 = scalar_lea.hbm %s2, %s16
          %s446 = sshll.u32 %s438, 4
          %s447 = int_to_ptr.vmem [resolvable:$true] %s446
          %s448 = sshll.u32 %s444, 4
          %s449 = int_to_ptr.hbm [resolvable:$true] %s448
          %451 = dma.vmem_to_hbm [thread:$0]  %s447, 16, %s449, %s436
        $region32: #{driver_forward.1} parent=27 // pred_fallthru
          _
      $region28: #{driver_forward.1} parent=5 // pred_fallthru
        _
      %p452 = scmp.le.s32.totalorder 2, %s11
      // Predicated region
      $region33: #{driver_forward.1} parent=5 // pred_check
        %p453 = pneg %p452
      $region34: #{driver_forward.1} parent=5 // pred_check_branch
        %455 = sbr.rel (%p453) target = $region36
      $region35: #{driver_forward.1} parent=5 // pred_region
        %s456 = ssub.s32 %s11, 2
        // Predicated region
        $region37: #{driver_forward.1} parent=35 // pred_check
          %p457 = pneg %p87
        $region38: #{driver_forward.1} parent=35 // pred_check_branch
          %459 = sbr.rel (%p457) target = $region40
        $region39: #{driver_forward.1} parent=35 // pred_region
          %s460 = sand.u32 %s72, 1
          %s461 = scalar_lea.sflag [#allocation3], %s460
          %s462 = sand.u32 %s72, 1
          %s463 = scalar_lea.vmem [#allocation2], %s462
          %465 = dma.done %s461, 16
        $region40: #{driver_forward.1} parent=35 // pred_fallthru
          _
      $region36: #{driver_forward.1} parent=5 // pred_fallthru
        _
    $region6: #{driver_forward.1} parent=1 // loop_footer
      %s15 = sadd.s32 1, %s11
    $region7: #{driver_forward.1} parent=1 // loop_footer_branch
      %10 = sbr.rel target = $region3
    $region8: #{driver_forward.1} parent=1 // loop_exit
      _
    %466 = vsyncpa [#allocation3], 1
    %s467 = scalar_lea.sflag [#allocation3], 1
    %468 = vsyncpa %s467, 1

</llo_original>
